<compile_context>
chip_gen: v5e
topology: v5e:2x2
jax: 0.10.0
libtpu: 0.0.40
codegen_flags: <defaults>
</compile_context>

<pallas_src>
import jax
import jax.numpy as jnp
from jax.experimental import pallas as pl
from jax.experimental.pallas import tpu as pltpu


def _round_up(n, m):
    return ((n + m - 1) // m) * m


def _num_tensorcores():
    """Best-effort TensorCores-per-device detection (v7x / megacore chips = 2)."""
    try:
        kind = jax.devices()[0].device_kind.lower()
    except Exception:
        return 1
    if ("v7" in kind) or ("v4" in kind) or ("v5p" in kind) or ("v5 p" in kind):
        return 2
    return 1


def actor_kernel(x_ref, w1_ref, w2_ref, w3_ref, b12_ref, c3_ref, o_ref):
    # fc1 + relu : (TM, D) @ (D, 256) -> (TM, 256), f32 accumulation on the MXU
    h1 = jnp.dot(x_ref[...], w1_ref[...], preferred_element_type=jnp.float32)
    h1 = jnp.maximum(h1 + b12_ref[0:1, :], 0.0)
    # fc2 + relu : (TM, 256) @ (256, 256) -> (TM, 256)
    h2 = jnp.dot(h1.astype(w2_ref.dtype), w2_ref[...],
                 preferred_element_type=jnp.float32)
    h2 = jnp.maximum(h2 + b12_ref[1:2, :], 0.0)
    # fc_mu + tanh : (TM, 256) @ (256, A_pad) -> (TM, A_pad)
    mu = jnp.dot(h2.astype(w3_ref.dtype), w3_ref[...],
                 preferred_element_type=jnp.float32)
    mu = jnp.tanh(mu + c3_ref[0:1, :])
    # action rescaling (lane-dense, unmasked store)
    o_ref[...] = mu * c3_ref[1:2, :] + c3_ref[2:3, :]


def prepare_actor_params(params):
    """One-time prep: bf16 weights, lane-padded fc_mu, packed bias/scale constants.

    Call once and reuse the result for every forward pass.
    """
    H1 = params["w1"].shape[1]
    H2 = params["w2"].shape[1]
    assert H1 == H2 == params["b1"].shape[1] == params["b2"].shape[1], (
        "b12 packing assumes fc1 and fc2 have identical width")
    A = params["w3"].shape[1]
    a_pad = _round_up(max(A, 128), 128)   # lane-dense output width

    w1 = params["w1"].astype(jnp.bfloat16)
    w2 = params["w2"].astype(jnp.bfloat16)
    w3 = jnp.zeros((H2, a_pad), jnp.bfloat16).at[:, :A].set(
        params["w3"].astype(jnp.bfloat16))

    # Pack small row-constants: (b1|b2) and (b3|action_scale|action_bias).
    b12 = jnp.concatenate([params["b1"], params["b2"]], axis=0).astype(jnp.float32)
    c3 = jnp.zeros((3, a_pad), jnp.float32)
    c3 = c3.at[0, :A].set(params["b3"][0])
    c3 = c3.at[1, :A].set(params["action_scale"][0])
    c3 = c3.at[2, :A].set(params["action_bias"][0])

    return {"w1": w1, "w2": w2, "w3": w3, "b12": b12, "c3": c3, "act_dim": A}


def actor_forward(x, prep, tm_max=512):
    """x: (B, obs_dim) float32. prep: output of prepare_actor_params. Returns (B, A) f32."""
    B, D = x.shape
    assert D == prep["w1"].shape[0], "obs_dim mismatch with fc1 weight"
    A = prep["act_dim"]
    a_pad = prep["w3"].shape[1]

    # --- generation-aware batch tiling ---------------------------------------
    b_pad = _round_up(B, 8)
    n_tc = _num_tensorcores()
    if n_tc >= 2 and b_pad >= 16:
        # keep >= n_tc parallel tiles so every TensorCore has work
        tm_eff = min(tm_max, _round_up(pl.cdiv(b_pad, n_tc), 8))
    else:
        # single TC: one grid step whenever the batch fits a tile
        tm_eff = min(tm_max, b_pad)
    grid = pl.cdiv(b_pad, tm_eff)
    b_total = grid * tm_eff

    # bf16 operand for the MXU; pad only when the batch doesn't tile evenly.
    x_bf = x.astype(jnp.bfloat16)
    if b_total != B:
        x_bf = jnp.zeros((b_total, D), jnp.bfloat16).at[:B].set(x_bf)

    const = lambda shape: pl.BlockSpec(shape, lambda i: (0, 0))

    out = pl.pallas_call(
        actor_kernel,
        out_shape=jax.ShapeDtypeStruct((b_total, a_pad), jnp.float32),
        grid=(grid,),
        in_specs=[
            pl.BlockSpec((tm_eff, D), lambda i: (i, 0)),   # x: tiled over batch
            const(prep["w1"].shape),                       # weights resident in VMEM
            const(prep["w2"].shape),
            const(prep["w3"].shape),
            const(prep["b12"].shape),
            const(prep["c3"].shape),
        ],
        out_specs=pl.BlockSpec((tm_eff, a_pad), lambda i: (i, 0)),
        compiler_params=pltpu.CompilerParams(
            dimension_semantics=("parallel",)),
    )(x_bf, prep["w1"], prep["w2"], prep["w3"], prep["b12"], prep["c3"])

    return out[:B, :A]


def init_actor_params(key, obs_dim, act_dim, action_high, action_low):
    """Deterministic, PyTorch-Linear-style uniform(-1/sqrt(fan_in), 1/sqrt(fan_in)) init."""
    def linear(key, fan_in, fan_out):
        kw, kb = jax.random.split(key)
        bound = 1.0 / jnp.sqrt(jnp.float32(fan_in))
        w = jax.random.uniform(kw, (fan_in, fan_out), jnp.float32, -bound, bound)
        b = jax.random.uniform(kb, (1, fan_out), jnp.float32, -bound, bound)
        return w, b

    k1, k2, k3 = jax.random.split(key, 3)
    w1, b1 = linear(k1, obs_dim, 256)
    w2, b2 = linear(k2, 256, 256)
    w3, b3 = linear(k3, 256, act_dim)
    action_high = jnp.asarray(action_high, jnp.float32).reshape(1, act_dim)
    action_low = jnp.asarray(action_low, jnp.float32).reshape(1, act_dim)
    return {
        "w1": w1, "b1": b1,
        "w2": w2, "b2": b2,
        "w3": w3, "b3": b3,
        "action_scale": (action_high - action_low) / 2.0,
        "action_bias": (action_high + action_low) / 2.0,
    }


def actor_forward_ref(x, p):
    """Pure-JAX f32 reference (mirrors the PyTorch forward)."""
    h1 = jax.nn.relu(x @ p["w1"] + p["b1"])
    h2 = jax.nn.relu(h1 @ p["w2"] + p["b2"])
    mu = jnp.tanh(h2 @ p["w3"] + p["b3"])
    return mu * p["action_scale"] + p["action_bias"]


if __name__ == "__main__":
    # Synthetic env: obs_dim=16, act_dim=6, action bounds [-2, 2] per dim.
    obs_dim, act_dim = 16, 6
    action_high = [2.0] * act_dim
    action_low = [-2.0] * act_dim

    key = jax.random.PRNGKey(0)
    kp, kx1, kx2, kx3 = jax.random.split(key, 4)
    params = init_actor_params(kp, obs_dim, act_dim, action_high, action_low)
    prep = prepare_actor_params(params)   # one-time, hoisted out of the hot path

    # Small inference-style batch (single-tile path on single-TC chips).
    x_small = jax.random.normal(kx1, (8, obs_dim), jnp.float32)
    out_small = jax.block_until_ready(actor_forward(x_small, prep))
    ref_small = actor_forward_ref(x_small, params)
    assert out_small.shape == (8, act_dim)
    assert jnp.allclose(out_small, ref_small, atol=5e-2, rtol=5e-2), \
        "small-batch mismatch vs reference"

    # Training-style batch (fits one 512-row tile on single-TC; 2 tiles on v7x).
    x_big = jax.random.normal(kx2, (256, obs_dim), jnp.float32)
    out_big = jax.block_until_ready(actor_forward(x_big, prep))
    ref_big = actor_forward_ref(x_big, params)
    assert out_big.shape == (256, act_dim)
    assert jnp.allclose(out_big, ref_big, atol=5e-2, rtol=5e-2), \
        "large-batch mismatch vs reference"

    # Ragged batch (exercises the pad-only-when-needed path).
    x_rag = jax.random.normal(kx3, (200, obs_dim), jnp.float32)
    out_rag = jax.block_until_ready(actor_forward(x_rag, prep))
    ref_rag = actor_forward_ref(x_rag, params)
    assert out_rag.shape == (200, act_dim)
    assert jnp.allclose(out_rag, ref_rag, atol=5e-2, rtol=5e-2), \
        "ragged-batch mismatch vs reference"

    print("KERNEL_OK")
</pallas_src>

<mosaic_0001>
module attributes {stable_mosaic.version = 11 : i64} {
  func.func @actor_kernel(%arg0: i32, %arg1: memref<8x16xbf16, #tpu.memory_space<vmem>>, %arg2: memref<16x256xbf16, #tpu.memory_space<vmem>>, %arg3: memref<256x256xbf16, #tpu.memory_space<vmem>>, %arg4: memref<256x128xbf16, #tpu.memory_space<vmem>>, %arg5: memref<2x256xf32, #tpu.memory_space<vmem>>, %arg6: memref<3x128xf32, #tpu.memory_space<vmem>>, %arg7: memref<8x128xf32, #tpu.memory_space<vmem>>) attributes {dimension_semantics = [#tpu.dimension_semantics<parallel>], iteration_bounds = array<i64: 1>, scalar_prefetch = 0 : i64, scratch_operands = 0 : i64, tpu.core_type = #tpu.core_type<tc>, window_params = [{transform_indices = @transform_0, window_bounds = array<i64: 8, 16>}, {pipeline_mode = #tpu.pipeline_mode<synchronous>, transform_indices = @transform_1, window_bounds = array<i64: 16, 256>}, {pipeline_mode = #tpu.pipeline_mode<synchronous>, transform_indices = @transform_2, window_bounds = array<i64: 256, 256>}, {pipeline_mode = #tpu.pipeline_mode<synchronous>, transform_indices = @transform_3, window_bounds = array<i64: 256, 128>}, {pipeline_mode = #tpu.pipeline_mode<synchronous>, transform_indices = @transform_4, window_bounds = array<i64: 2, 256>}, {pipeline_mode = #tpu.pipeline_mode<synchronous>, transform_indices = @transform_5, window_bounds = array<i64: 3, 128>}, {transform_indices = @transform_6, window_bounds = array<i64: 8, 128>}]} {
    %c0 = arith.constant 0 : index
    %c0_0 = arith.constant 0 : index
    %0 = vector.load %arg1[%c0, %c0_0] : memref<8x16xbf16, #tpu.memory_space<vmem>>, vector<8x16xbf16>
    %c0_1 = arith.constant 0 : index
    %c0_2 = arith.constant 0 : index
    %1 = vector.load %arg2[%c0_1, %c0_2] : memref<16x256xbf16, #tpu.memory_space<vmem>>, vector<16x256xbf16>
    %cst = arith.constant dense<0.000000e+00> : vector<8x256xf32>
    %2 = tpu.matmul %0, %1, %cst {dimension_numbers = #tpu.dot_dimension_numbers<[1], [0], [0], [1], [0, 0, 1, 1], [], []>} : vector<8x16xbf16>, vector<16x256xbf16>, vector<8x256xf32> -> vector<8x256xf32>
    %c0_3 = arith.constant 0 : index
    %c0_4 = arith.constant 0 : index
    %3 = vector.load %arg5[%c0_3, %c0_4] : memref<2x256xf32, #tpu.memory_space<vmem>>, vector<1x256xf32>
    %4 = vector.broadcast %3 : vector<1x256xf32> to vector<8x256xf32>
    %5 = arith.addf %2, %4 : vector<8x256xf32>
    %cst_5 = arith.constant 0.000000e+00 : f32
    %6 = vector.broadcast %cst_5 : f32 to vector<8x256xf32>
    %7 = arith.maximumf %5, %6 : vector<8x256xf32>
    %8 = arith.truncf %7 : vector<8x256xf32> to vector<8x256xbf16>
    %c0_6 = arith.constant 0 : index
    %c0_7 = arith.constant 0 : index
    %9 = vector.load %arg3[%c0_6, %c0_7] : memref<256x256xbf16, #tpu.memory_space<vmem>>, vector<256x256xbf16>
    %cst_8 = arith.constant dense<0.000000e+00> : vector<8x256xf32>
    %10 = tpu.matmul %8, %9, %cst_8 {dimension_numbers = #tpu.dot_dimension_numbers<[1], [0], [0], [1], [0, 0, 1, 1], [], []>} : vector<8x256xbf16>, vector<256x256xbf16>, vector<8x256xf32> -> vector<8x256xf32>
    %c1 = arith.constant 1 : index
    %c0_9 = arith.constant 0 : index
    %11 = vector.load %arg5[%c1, %c0_9] : memref<2x256xf32, #tpu.memory_space<vmem>>, vector<1x256xf32>
    %12 = vector.broadcast %11 : vector<1x256xf32> to vector<8x256xf32>
    %13 = arith.addf %10, %12 : vector<8x256xf32>
    %cst_10 = arith.constant 0.000000e+00 : f32
    %14 = vector.broadcast %cst_10 : f32 to vector<8x256xf32>
    %15 = arith.maximumf %13, %14 : vector<8x256xf32>
    %16 = arith.truncf %15 : vector<8x256xf32> to vector<8x256xbf16>
    %c0_11 = arith.constant 0 : index
    %c0_12 = arith.constant 0 : index
    %17 = vector.load %arg4[%c0_11, %c0_12] : memref<256x128xbf16, #tpu.memory_space<vmem>>, vector<256x128xbf16>
    %cst_13 = arith.constant dense<0.000000e+00> : vector<8x128xf32>
    %18 = tpu.matmul %16, %17, %cst_13 {dimension_numbers = #tpu.dot_dimension_numbers<[1], [0], [0], [1], [0, 0, 1, 1], [], []>} : vector<8x256xbf16>, vector<256x128xbf16>, vector<8x128xf32> -> vector<8x128xf32>
    %c0_14 = arith.constant 0 : index
    %c0_15 = arith.constant 0 : index
    %19 = vector.load %arg6[%c0_14, %c0_15] : memref<3x128xf32, #tpu.memory_space<vmem>>, vector<1x128xf32>
    %20 = vector.broadcast %19 : vector<1x128xf32> to vector<8x128xf32>
    %21 = arith.addf %18, %20 : vector<8x128xf32>
    %22 = math.tanh %21 : vector<8x128xf32>
    %c1_16 = arith.constant 1 : index
    %c0_17 = arith.constant 0 : index
    %23 = vector.load %arg6[%c1_16, %c0_17] : memref<3x128xf32, #tpu.memory_space<vmem>>, vector<1x128xf32>
    %24 = vector.broadcast %23 : vector<1x128xf32> to vector<8x128xf32>
    %25 = arith.mulf %22, %24 : vector<8x128xf32>
    %c2 = arith.constant 2 : index
    %c0_18 = arith.constant 0 : index
    %26 = vector.load %arg6[%c2, %c0_18] : memref<3x128xf32, #tpu.memory_space<vmem>>, vector<1x128xf32>
    %27 = vector.broadcast %26 : vector<1x128xf32> to vector<8x128xf32>
    %28 = arith.addf %25, %27 : vector<8x128xf32>
    %c0_19 = arith.constant 0 : index
    %c0_20 = arith.constant 0 : index
    %29 = vector.load %arg7[%c0_19, %c0_20] : memref<8x128xf32, #tpu.memory_space<vmem>>, vector<8x128xf32>
    tpu.vector_store %arg7[%c0_19, %c0_20], %28 {strides = array<i32>} : memref<8x128xf32, #tpu.memory_space<vmem>>, vector<8x128xf32>,
    return
  }
  func.func @transform_0(%arg0: i32) -> (i32, i32) {
    %c0_i32 = arith.constant 0 : i32
    %c0_i32_0 = arith.constant 0 : i32
    return %arg0, %c0_i32 : i32, i32
  }
  func.func @transform_1(%arg0: i32) -> (i32, i32) {
    %c0_i32 = arith.constant 0 : i32
    %c0_i32_0 = arith.constant 0 : i32
    %c0_i32_1 = arith.constant 0 : i32
    return %c0_i32, %c0_i32_0 : i32, i32
  }
  func.func @transform_2(%arg0: i32) -> (i32, i32) {
    %c0_i32 = arith.constant 0 : i32
    %c0_i32_0 = arith.constant 0 : i32
    %c0_i32_1 = arith.constant 0 : i32
    return %c0_i32, %c0_i32_0 : i32, i32
  }
  func.func @transform_3(%arg0: i32) -> (i32, i32) {
    %c0_i32 = arith.constant 0 : i32
    %c0_i32_0 = arith.constant 0 : i32
    %c0_i32_1 = arith.constant 0 : i32
    return %c0_i32, %c0_i32_0 : i32, i32
  }
  func.func @transform_4(%arg0: i32) -> (i32, i32) {
    %c0_i32 = arith.constant 0 : i32
    %c0_i32_0 = arith.constant 0 : i32
    %c0_i32_1 = arith.constant 0 : i32
    return %c0_i32, %c0_i32_0 : i32, i32
  }
  func.func @transform_5(%arg0: i32) -> (i32, i32) {
    %c0_i32 = arith.constant 0 : i32
    %c0_i32_0 = arith.constant 0 : i32
    %c0_i32_1 = arith.constant 0 : i32
    return %c0_i32, %c0_i32_0 : i32, i32
  }
  func.func @transform_6(%arg0: i32) -> (i32, i32) {
    %c0_i32 = arith.constant 0 : i32
    %c0_i32_0 = arith.constant 0 : i32
    return %arg0, %c0_i32 : i32, i32
  }
}

</mosaic_0001>

<llo_original>
// kernel: tpu_custom_call.1
$region0: #{tpu_custom_call.1}
  #allocation0 [shape = 'u32[]', space=smem, size = 0x4, offset = 0x4, fixed_abs, tag = 'smem constant byte address 0x4 - core index']
  #allocation1 [shape = 'u32[72,128]{1,0:T(1,128)}', space=vmem, size = 0x9000, scoped, tag = 'internal scratch']
  %s0 = inlined_call_operand.hbm [shape: bf16[8,16], index: 0, kind: input, shape index: {}]
  %s1 = inlined_call_operand.hbm [shape: bf16[16,256], index: 1, kind: input, shape index: {}]
  %s2 = inlined_call_operand.hbm [shape: bf16[256,256], index: 2, kind: input, shape index: {}]
  %s3 = inlined_call_operand.hbm [shape: bf16[256,128], index: 3, kind: input, shape index: {}]
  %s4 = inlined_call_operand.hbm [shape: f32[2,256], index: 4, kind: input, shape index: {}]
  %s5 = inlined_call_operand.vmem [shape: f32[3,128], index: 5, kind: input, shape index: {}]
  %s6 = inlined_call_operand.hbm [shape: f32[8,128], index: 6, kind: output, shape index: {}]
  %s7 = sld [smem:[#allocation0]]
  $region54: #{tpu_custom_call.1} parent=0
    _
  %s9 = ssub.s32 1, %s7
  %s10 = scalar_select 0, %s9, %s7
  $region1: #{tpu_custom_call.1} parent=0
    #allocation2 [shape = 'u8[2048]{0}', space=vmem, size = 0x800, scoped, tag = 'input window, operand 0, single buffered']
    #allocation3 [shape = 's32[1]{0}', space=sflag, size = 0x4, scoped, tag = 'scoped memory for tpu_custom_call.1']
    #allocation4 [shape = 's32[1]{0}', space=sflag, size = 0x4, scoped, tag = 'scoped memory for tpu_custom_call.1']
    #allocation5 [shape = 'u8[8192]{0}', space=vmem, size = 0x2000, scoped, tag = 'input window, operand 1, single buffered']
    #allocation6 [shape = 's32[1]{0}', space=sflag, size = 0x4, scoped, tag = 'scoped memory for tpu_custom_call.1']
    #allocation7 [shape = 'u8[131072]{0}', space=vmem, size = 0x20000, scoped, tag = 'input window, operand 2, single buffered']
    #allocation8 [shape = 'u8[65536]{0}', space=vmem, size = 0x10000, scoped, tag = 'input window, operand 3, single buffered']
    #allocation9 [shape = 's32[1]{0}', space=sflag, size = 0x4, scoped, tag = 'scoped memory for tpu_custom_call.1']
    #allocation10 [shape = 'u8[2048]{0}', space=vmem, size = 0x800, scoped, tag = 'input window, operand 4, single buffered']
    #allocation11 [shape = 'u8[4096]{0}', space=vmem, size = 0x1000, scoped, tag = 'output window, operand 0, single buffered']
    %11 = vsyncpa [#allocation3], 0
    %12 = vsyncpa [#allocation6], 0
    %13 = vsyncpa [#allocation9], 0
    %14 = vsyncpa [#allocation4], 0
    // Predicated region
    $region2: #{tpu_custom_call.1} parent=1 // pred_check
      _
    $region3: #{tpu_custom_call.1} parent=1 // pred_check_branch
      %16 = sbr.rel (0) target = $region5
    $region4: #{tpu_custom_call.1} parent=1 // pred_region
      %18 = vsyncadd [#allocation3], 0
      %s20 = sshll.u32 %s0, 4
      %s21 = int_to_ptr.hbm [resolvable:$true] %s20
      %s22 = sshll.u32 [#allocation2], 4
      %s23 = int_to_ptr.vmem [resolvable:$true] %s22
      %25 = dma.hbm_to_vmem [thread:$0]  %s21, 64, %s23, [#allocation3]
    $region5: #{tpu_custom_call.1} parent=1 // pred_fallthru
      _
    // Predicated region
    $region6: #{tpu_custom_call.1} parent=1 // pred_check
      _
    $region7: #{tpu_custom_call.1} parent=1 // pred_check_branch
      %27 = sbr.rel (0) target = $region9
    $region8: #{tpu_custom_call.1} parent=1 // pred_region
      %29 = vsyncadd [#allocation6], 0
      %s30 = sshll.u32 %s1, 4
      %s31 = int_to_ptr.hbm [resolvable:$true] %s30
      %s32 = sshll.u32 [#allocation5], 4
      %s33 = int_to_ptr.vmem [resolvable:$true] %s32
      %38 = dma.hbm_to_vmem [thread:$0]  %s31, 256, %s33, [#allocation6], 128, 128, 8
    $region9: #{tpu_custom_call.1} parent=1 // pred_fallthru
      _
    // Predicated region
    $region10: #{tpu_custom_call.1} parent=1 // pred_check
      _
    $region11: #{tpu_custom_call.1} parent=1 // pred_check_branch
      %40 = sbr.rel (0) target = $region13
    $region12: #{tpu_custom_call.1} parent=1 // pred_region
      %42 = vsyncadd [#allocation6], 0
      %s43 = sshll.u32 %s2, 4
      %s44 = int_to_ptr.hbm [resolvable:$true] %s43
      %s45 = sshll.u32 [#allocation7], 4
      %s46 = int_to_ptr.vmem [resolvable:$true] %s45
      %51 = dma.hbm_to_vmem [thread:$0]  %s44, 4096, %s46, [#allocation6], 128, 128, 8
    $region13: #{tpu_custom_call.1} parent=1 // pred_fallthru
      _
    // Predicated region
    $region14: #{tpu_custom_call.1} parent=1 // pred_check
      _
    $region15: #{tpu_custom_call.1} parent=1 // pred_check_branch
      %53 = sbr.rel (0) target = $region17
    $region16: #{tpu_custom_call.1} parent=1 // pred_region
      %55 = vsyncadd [#allocation9], 0
      %s56 = sshll.u32 %s3, 4
      %s57 = int_to_ptr.hbm [resolvable:$true] %s56
      %s58 = sshll.u32 [#allocation8], 4
      %s59 = int_to_ptr.vmem [resolvable:$true] %s58
      %64 = dma.hbm_to_vmem [thread:$0]  %s57, 2048, %s59, [#allocation9], 64, 64, 4
    $region17: #{tpu_custom_call.1} parent=1 // pred_fallthru
      _
    // Predicated region
    $region18: #{tpu_custom_call.1} parent=1 // pred_check
      _
    $region19: #{tpu_custom_call.1} parent=1 // pred_check_branch
      %66 = sbr.rel (0) target = $region21
    $region20: #{tpu_custom_call.1} parent=1 // pred_region
      %68 = vsyncadd [#allocation9], 0
      %s70 = sshll.u32 %s4, 4
      %s71 = int_to_ptr.hbm [resolvable:$true] %s70
      %s72 = sshll.u32 [#allocation10], 4
      %s73 = int_to_ptr.vmem [resolvable:$true] %s72
      %75 = dma.hbm_to_vmem [thread:$0]  %s71, 64, %s73, [#allocation9]
    $region21: #{tpu_custom_call.1} parent=1 // pred_fallthru
      _
    // Predicated region
    $region22: #{tpu_custom_call.1} parent=1 // pred_check
      _
    $region23: #{tpu_custom_call.1} parent=1 // pred_check_branch
      %77 = sbr.rel (0) target = $region25
    $region24: #{tpu_custom_call.1} parent=1 // pred_region
      _
    $region25: #{tpu_custom_call.1} parent=1 // pred_fallthru
      _
    // Predicated region
    $region26: #{tpu_custom_call.1} parent=1 // pred_check
      _
    $region27: #{tpu_custom_call.1} parent=1 // pred_check_branch
      %79 = sbr.rel (0) target = $region29
    $region28: #{tpu_custom_call.1} parent=1 // pred_region
      %81 = dma.done [#allocation3], 64
    $region29: #{tpu_custom_call.1} parent=1 // pred_fallthru
      _
    // Predicated region
    $region30: #{tpu_custom_call.1} parent=1 // pred_check
      _
    $region31: #{tpu_custom_call.1} parent=1 // pred_check_branch
      %83 = sbr.rel (0) target = $region33
    $region32: #{tpu_custom_call.1} parent=1 // pred_region
      %85 = dma.done [#allocation6], 256
    $region33: #{tpu_custom_call.1} parent=1 // pred_fallthru
      _
    // Predicated region
    $region34: #{tpu_custom_call.1} parent=1 // pred_check
      _
    $region35: #{tpu_custom_call.1} parent=1 // pred_check_branch
      %87 = sbr.rel (0) target = $region37
    $region36: #{tpu_custom_call.1} parent=1 // pred_region
      %89 = dma.done [#allocation6], 4096
    $region37: #{tpu_custom_call.1} parent=1 // pred_fallthru
      _
    // Predicated region
    $region38: #{tpu_custom_call.1} parent=1 // pred_check
      _
    $region39: #{tpu_custom_call.1} parent=1 // pred_check_branch
      %91 = sbr.rel (0) target = $region41
    $region40: #{tpu_custom_call.1} parent=1 // pred_region
      %93 = dma.done [#allocation9], 2048
    $region41: #{tpu_custom_call.1} parent=1 // pred_fallthru
      _
    // Predicated region
    $region42: #{tpu_custom_call.1} parent=1 // pred_check
      _
    $region43: #{tpu_custom_call.1} parent=1 // pred_check_branch
      %95 = sbr.rel (0) target = $region45
    $region44: #{tpu_custom_call.1} parent=1 // pred_region
      %97 = dma.done [#allocation9], 64
    $region45: #{tpu_custom_call.1} parent=1 // pred_fallthru
      _
    %v99 = vld [vmem:[#allocation2] sm:$0xf]
    %v100 = vld [vmem:[#allocation5] sm:$0xff]
    %v101 = vld [vmem:[#allocation5 + $0x8] sm:$0xff]
    %v102 = vld [vmem:[#allocation10] ss:$2 sm:$0x3]
    %v104 = vperm.slane %v102, 0
    %v105 = vperm.slane %v102, 1
    %v110 = vunpack.c.l.b16 %v100
    %v111 = vunpack.c.h.b16 %v100
    %v112 = vunpack.c.l.b16 %v101
    %v113 = vunpack.c.h.b16 %v101
    %v114 = vpack.c.b16 %v112, %v110
    %v115 = vpack.c.b16 %v113, %v111
    %vm118 = vcmask 130048
    %v120 = vsel %vm118, %v99, 0
    %122 = vmatpush.bf16.msra.mxu0 0
    %123 = vmatpush.bf16.msra.mxu0 0
    %124 = vmatpush.bf16.msra.mxu0 0
    %125 = vmatpush.bf16.msra.mxu0 0
    %126 = vmatpush.bf16.msra.mxu0 0
    %127 = vmatpush.bf16.msra.mxu0 0
    %128 = vmatpush.bf16.msra.mxu0 0
    %129 = vmatpush.bf16.msra.mxu0 %v114
    %130 = vmatmul.bf16.gmra.mxu0 %v120
    %v131 = vpop.f32.mrf.mxu0
    %v132 = vadd.f32 %v104, %v131
    %v133 = vpop.f32.mrf.mxu0
    %134 = vdwg.mxu0
    %135 = vmatpush.bf16.msra.mxu0 0
    %136 = vmatpush.bf16.msra.mxu0 0
    %137 = vmatpush.bf16.msra.mxu0 0
    %138 = vmatpush.bf16.msra.mxu0 0
    %139 = vmatpush.bf16.msra.mxu0 0
    %140 = vmatpush.bf16.msra.mxu0 0
    %141 = vmatpush.bf16.msra.mxu0 0
    %142 = vmatpush.bf16.msra.mxu0 %v115
    %143 = vmatmul.bf16.gmra.mxu0 %v120
    %v144 = vpop.f32.mrf.mxu0
    %v145 = vadd.f32 %v105, %v144
    %v146 = vpop.f32.mrf.mxu0
    %147 = vdwg.mxu0
    %v148 = vmax.f32 %v132, 0.0
    %v149 = vmax.f32 %v145, 0.0
    %v150 = vpack.c.bf16 %v148, %v148
    %v151 = vpack.c.bf16 %v149, %v149
    %v152 = vld [vmem:[#allocation7] sm:$0xff]
    %v153 = vld [vmem:[#allocation7 + $0x8] sm:$0xff]
    %v154 = vld [vmem:[#allocation7 + $0x10] sm:$0xff]
    %v155 = vld [vmem:[#allocation7 + $0x18] sm:$0xff]
    %v156 = vld [vmem:[#allocation7 + $0x20] sm:$0xff]
    %v157 = vld [vmem:[#allocation7 + $0x28] sm:$0xff]
    %v158 = vld [vmem:[#allocation7 + $0x30] sm:$0xff]
    %v159 = vld [vmem:[#allocation7 + $0x38] sm:$0xff]
    %v160 = vld [vmem:[#allocation7 + $0x40] sm:$0xff]
    %v161 = vld [vmem:[#allocation7 + $0x48] sm:$0xff]
    %v162 = vld [vmem:[#allocation7 + $0x50] sm:$0xff]
    %v163 = vld [vmem:[#allocation7 + $0x58] sm:$0xff]
    %v164 = vld [vmem:[#allocation7 + $0x60] sm:$0xff]
    %v165 = vld [vmem:[#allocation7 + $0x68] sm:$0xff]
    %v166 = vld [vmem:[#allocation7 + $0x70] sm:$0xff]
    %v167 = vld [vmem:[#allocation7 + $0x78] sm:$0xff]
    %v168 = vld [vmem:[#allocation7 + $0x80] sm:$0xff]
    %v169 = vld [vmem:[#allocation7 + $0x88] sm:$0xff]
    %v170 = vld [vmem:[#allocation7 + $0x90] sm:$0xff]
    %v171 = vld [vmem:[#allocation7 + $0x98] sm:$0xff]
    %v172 = vld [vmem:[#allocation7 + $0xa0] sm:$0xff]
    %v173 = vld [vmem:[#allocation7 + $0xa8] sm:$0xff]
    %v174 = vld [vmem:[#allocation7 + $0xb0] sm:$0xff]
    %v175 = vld [vmem:[#allocation7 + $0xb8] sm:$0xff]
    %v176 = vld [vmem:[#allocation7 + $0xc0] sm:$0xff]
    %v177 = vld [vmem:[#allocation7 + $0xc8] sm:$0xff]
    %v178 = vld [vmem:[#allocation7 + $0xd0] sm:$0xff]
    %v179 = vld [vmem:[#allocation7 + $0xd8] sm:$0xff]
    %v180 = vld [vmem:[#allocation7 + $0xe0] sm:$0xff]
    %v181 = vld [vmem:[#allocation7 + $0xe8] sm:$0xff]
    %v182 = vld [vmem:[#allocation7 + $0xf0] sm:$0xff]
    %v183 = vld [vmem:[#allocation7 + $0xf8] sm:$0xff]
    %s184 = scalar_lea.vmem [#allocation10], 1
    %v185 = vld [vmem:[%s184] ss:$2 sm:$0x3]
    %v187 = vperm.slane %v185, 0
    %v188 = vperm.slane %v185, 1
    %v223 = vunpack.c.l.b16 %v152
    %v224 = vunpack.c.h.b16 %v152
    %v225 = vunpack.c.l.b16 %v153
    %v226 = vunpack.c.h.b16 %v153
    %v227 = vunpack.c.l.b16 %v154
    %v228 = vunpack.c.h.b16 %v154
    %v229 = vunpack.c.l.b16 %v155
    %v230 = vunpack.c.h.b16 %v155
    %v231 = vunpack.c.l.b16 %v156
    %v232 = vunpack.c.h.b16 %v156
    %v233 = vunpack.c.l.b16 %v157
    %v234 = vunpack.c.h.b16 %v157
    %v235 = vunpack.c.l.b16 %v158
    %v236 = vunpack.c.h.b16 %v158
    %v237 = vunpack.c.l.b16 %v159
    %v238 = vunpack.c.h.b16 %v159
    %v239 = vunpack.c.l.b16 %v160
    %v240 = vunpack.c.h.b16 %v160
    %v241 = vunpack.c.l.b16 %v161
    %v242 = vunpack.c.h.b16 %v161
    %v243 = vunpack.c.l.b16 %v162
    %v244 = vunpack.c.h.b16 %v162
    %v245 = vunpack.c.l.b16 %v163
    %v246 = vunpack.c.h.b16 %v163
    %v247 = vunpack.c.l.b16 %v164
    %v248 = vunpack.c.h.b16 %v164
    %v249 = vunpack.c.l.b16 %v165
    %v250 = vunpack.c.h.b16 %v165
    %v251 = vunpack.c.l.b16 %v166
    %v252 = vunpack.c.h.b16 %v166
    %v253 = vunpack.c.l.b16 %v167
    %v254 = vunpack.c.h.b16 %v167
    %v255 = vunpack.c.l.b16 %v168
    %v256 = vunpack.c.h.b16 %v168
    %v257 = vunpack.c.l.b16 %v169
    %v258 = vunpack.c.h.b16 %v169
    %v259 = vunpack.c.l.b16 %v170
    %v260 = vunpack.c.h.b16 %v170
    %v261 = vunpack.c.l.b16 %v171
    %v262 = vunpack.c.h.b16 %v171
    %v263 = vunpack.c.l.b16 %v172
    %v264 = vunpack.c.h.b16 %v172
    %v265 = vunpack.c.l.b16 %v173
    %v266 = vunpack.c.h.b16 %v173
    %v267 = vunpack.c.l.b16 %v174
    %v268 = vunpack.c.h.b16 %v174
    %v269 = vunpack.c.l.b16 %v175
    %v270 = vunpack.c.h.b16 %v175
    %v271 = vunpack.c.l.b16 %v176
    %v272 = vunpack.c.h.b16 %v176
    %v273 = vunpack.c.l.b16 %v177
    %v274 = vunpack.c.h.b16 %v177
    %v275 = vunpack.c.l.b16 %v178
    %v276 = vunpack.c.h.b16 %v178
    %v277 = vunpack.c.l.b16 %v179
    %v278 = vunpack.c.h.b16 %v179
    %v279 = vunpack.c.l.b16 %v180
    %v280 = vunpack.c.h.b16 %v180
    %v281 = vunpack.c.l.b16 %v181
    %v282 = vunpack.c.h.b16 %v181
    %v283 = vunpack.c.l.b16 %v182
    %v284 = vunpack.c.h.b16 %v182
    %v285 = vunpack.c.l.b16 %v183
    %v286 = vunpack.c.h.b16 %v183
    %v287 = vpack.c.b16 %v225, %v223
    %v288 = vpack.c.b16 %v226, %v224
    %v289 = vpack.c.b16 %v229, %v227
    %v290 = vpack.c.b16 %v230, %v228
    %v291 = vpack.c.b16 %v233, %v231
    %v292 = vpack.c.b16 %v234, %v232
    %v293 = vpack.c.b16 %v237, %v235
    %v294 = vpack.c.b16 %v238, %v236
    %v295 = vpack.c.b16 %v241, %v239
    %v296 = vpack.c.b16 %v242, %v240
    %v297 = vpack.c.b16 %v245, %v243
    %v298 = vpack.c.b16 %v246, %v244
    %v299 = vpack.c.b16 %v249, %v247
    %v300 = vpack.c.b16 %v250, %v248
    %v301 = vpack.c.b16 %v253, %v251
    %v302 = vpack.c.b16 %v254, %v252
    %v303 = vpack.c.b16 %v257, %v255
    %v304 = vpack.c.b16 %v258, %v256
    %v305 = vpack.c.b16 %v261, %v259
    %v306 = vpack.c.b16 %v262, %v260
    %v307 = vpack.c.b16 %v265, %v263
    %v308 = vpack.c.b16 %v266, %v264
    %v309 = vpack.c.b16 %v269, %v267
    %v310 = vpack.c.b16 %v270, %v268
    %v311 = vpack.c.b16 %v273, %v271
    %v312 = vpack.c.b16 %v274, %v272
    %v313 = vpack.c.b16 %v277, %v275
    %v314 = vpack.c.b16 %v278, %v276
    %v315 = vpack.c.b16 %v281, %v279
    %v316 = vpack.c.b16 %v282, %v280
    %v317 = vpack.c.b16 %v285, %v283
    %v318 = vpack.c.b16 %v286, %v284
    %351 = vmatpush.bf16.msra.mxu0 %v301
    %352 = vmatpush.bf16.msra.mxu0 %v299
    %353 = vmatpush.bf16.msra.mxu0 %v297
    %354 = vmatpush.bf16.msra.mxu0 %v295
    %355 = vmatpush.bf16.msra.mxu0 %v293
    %356 = vmatpush.bf16.msra.mxu0 %v291
    %357 = vmatpush.bf16.msra.mxu0 %v289
    %358 = vmatpush.bf16.msra.mxu0 %v287
    %359 = vmatmul.bf16.gmra.mxu0 %v150
    %v360 = vpop.f32.mrf.mxu0
    %v361 = vadd.f32 %v187, %v360
    %v362 = vpop.f32.mrf.mxu0
    %363 = vdwg.mxu0
    %364 = vmatpush.bf16.msra.mxu0 %v317
    %365 = vmatpush.bf16.msra.mxu0 %v315
    %366 = vmatpush.bf16.msra.mxu0 %v313
    %367 = vmatpush.bf16.msra.mxu0 %v311
    %368 = vmatpush.bf16.msra.mxu0 %v309
    %369 = vmatpush.bf16.msra.mxu0 %v307
    %370 = vmatpush.bf16.msra.mxu0 %v305
    %371 = vmatpush.bf16.msra.mxu0 %v303
    %372 = vmatmul.bf16.gmra.mxu0 %v151
    %v373 = vpop.f32.mrf.mxu0
    %v374 = vadd.f32 %v361, %v373
    %v375 = vpop.f32.mrf.mxu0
    %376 = vdwg.mxu0
    %377 = vmatpush.bf16.msra.mxu0 %v302
    %378 = vmatpush.bf16.msra.mxu0 %v300
    %379 = vmatpush.bf16.msra.mxu0 %v298
    %380 = vmatpush.bf16.msra.mxu0 %v296
    %381 = vmatpush.bf16.msra.mxu0 %v294
    %382 = vmatpush.bf16.msra.mxu0 %v292
    %383 = vmatpush.bf16.msra.mxu0 %v290
    %384 = vmatpush.bf16.msra.mxu0 %v288
    %385 = vmatmul.bf16.gmra.mxu0 %v150
    %v386 = vpop.f32.mrf.mxu0
    %v387 = vadd.f32 %v188, %v386
    %v388 = vpop.f32.mrf.mxu0
    %389 = vdwg.mxu0
    %390 = vmatpush.bf16.msra.mxu0 %v318
    %391 = vmatpush.bf16.msra.mxu0 %v316
    %392 = vmatpush.bf16.msra.mxu0 %v314
    %393 = vmatpush.bf16.msra.mxu0 %v312
    %394 = vmatpush.bf16.msra.mxu0 %v310
    %395 = vmatpush.bf16.msra.mxu0 %v308
    %396 = vmatpush.bf16.msra.mxu0 %v306
    %397 = vmatpush.bf16.msra.mxu0 %v304
    %398 = vmatmul.bf16.gmra.mxu0 %v151
    %v399 = vpop.f32.mrf.mxu0
    %v400 = vadd.f32 %v387, %v399
    %v401 = vpop.f32.mrf.mxu0
    %402 = vdwg.mxu0
    %v403 = vmax.f32 %v374, 0.0
    %v404 = vmax.f32 %v400, 0.0
    %v405 = vpack.c.bf16 %v403, %v403
    %v406 = vpack.c.bf16 %v404, %v404
    %v407 = vld [vmem:[#allocation8] sm:$0xf]
    %v408 = vld [vmem:[#allocation8 + $0x4] sm:$0xf]
    %v409 = vld [vmem:[#allocation8 + $0x8] sm:$0xf]
    %v410 = vld [vmem:[#allocation8 + $0xc] sm:$0xf]
    %v411 = vld [vmem:[#allocation8 + $0x10] sm:$0xf]
    %v412 = vld [vmem:[#allocation8 + $0x14] sm:$0xf]
    %v413 = vld [vmem:[#allocation8 + $0x18] sm:$0xf]
    %v414 = vld [vmem:[#allocation8 + $0x1c] sm:$0xf]
    %v415 = vld [vmem:[#allocation8 + $0x20] sm:$0xf]
    %v416 = vld [vmem:[#allocation8 + $0x24] sm:$0xf]
    %v417 = vld [vmem:[#allocation8 + $0x28] sm:$0xf]
    %v418 = vld [vmem:[#allocation8 + $0x2c] sm:$0xf]
    %v419 = vld [vmem:[#allocation8 + $0x30] sm:$0xf]
    %v420 = vld [vmem:[#allocation8 + $0x34] sm:$0xf]
    %v421 = vld [vmem:[#allocation8 + $0x38] sm:$0xf]
    %v422 = vld [vmem:[#allocation8 + $0x3c] sm:$0xf]
    %v423 = vld [vmem:[#allocation8 + $0x40] sm:$0xf]
    %v424 = vld [vmem:[#allocation8 + $0x44] sm:$0xf]
    %v425 = vld [vmem:[#allocation8 + $0x48] sm:$0xf]
    %v426 = vld [vmem:[#allocation8 + $0x4c] sm:$0xf]
    %v427 = vld [vmem:[#allocation8 + $0x50] sm:$0xf]
    %v428 = vld [vmem:[#allocation8 + $0x54] sm:$0xf]
    %v429 = vld [vmem:[#allocation8 + $0x58] sm:$0xf]
    %v430 = vld [vmem:[#allocation8 + $0x5c] sm:$0xf]
    %v431 = vld [vmem:[#allocation8 + $0x60] sm:$0xf]
    %v432 = vld [vmem:[#allocation8 + $0x64] sm:$0xf]
    %v433 = vld [vmem:[#allocation8 + $0x68] sm:$0xf]
    %v434 = vld [vmem:[#allocation8 + $0x6c] sm:$0xf]
    %v435 = vld [vmem:[#allocation8 + $0x70] sm:$0xf]
    %v436 = vld [vmem:[#allocation8 + $0x74] sm:$0xf]
    %v437 = vld [vmem:[#allocation8 + $0x78] sm:$0xf]
    %v438 = vld [vmem:[#allocation8 + $0x7c] sm:$0xf]
    %v439 = vld [vmem:[%s5] sm:$0x1]
    %v440 = vperm.slane %v439, 0
    %v473 = vunpack.c.l.b16 %v407
    %v474 = vunpack.c.l.b16 %v408
    %v475 = vunpack.c.l.b16 %v409
    %v476 = vunpack.c.l.b16 %v410
    %v477 = vunpack.c.l.b16 %v411
    %v478 = vunpack.c.l.b16 %v412
    %v479 = vunpack.c.l.b16 %v413
    %v480 = vunpack.c.l.b16 %v414
    %v481 = vunpack.c.l.b16 %v415
    %v482 = vunpack.c.l.b16 %v416
    %v483 = vunpack.c.l.b16 %v417
    %v484 = vunpack.c.l.b16 %v418
    %v485 = vunpack.c.l.b16 %v419
    %v486 = vunpack.c.l.b16 %v420
    %v487 = vunpack.c.l.b16 %v421
    %v488 = vunpack.c.l.b16 %v422
    %v489 = vunpack.c.l.b16 %v423
    %v490 = vunpack.c.l.b16 %v424
    %v491 = vunpack.c.l.b16 %v425
    %v492 = vunpack.c.l.b16 %v426
    %v493 = vunpack.c.l.b16 %v427
    %v494 = vunpack.c.l.b16 %v428
    %v495 = vunpack.c.l.b16 %v429
    %v496 = vunpack.c.l.b16 %v430
    %v497 = vunpack.c.l.b16 %v431
    %v498 = vunpack.c.l.b16 %v432
    %v499 = vunpack.c.l.b16 %v433
    %v500 = vunpack.c.l.b16 %v434
    %v501 = vunpack.c.l.b16 %v435
    %v502 = vunpack.c.l.b16 %v436
    %v503 = vunpack.c.l.b16 %v437
    %v504 = vunpack.c.l.b16 %v438
    %v505 = vpack.c.b16 %v474, %v473
    %v506 = vpack.c.b16 %v476, %v475
    %v507 = vpack.c.b16 %v478, %v477
    %v508 = vpack.c.b16 %v480, %v479
    %v509 = vpack.c.b16 %v482, %v481
    %v510 = vpack.c.b16 %v484, %v483
    %v511 = vpack.c.b16 %v486, %v485
    %v512 = vpack.c.b16 %v488, %v487
    %v513 = vpack.c.b16 %v490, %v489
    %v514 = vpack.c.b16 %v492, %v491
    %v515 = vpack.c.b16 %v494, %v493
    %v516 = vpack.c.b16 %v496, %v495
    %v517 = vpack.c.b16 %v498, %v497
    %v518 = vpack.c.b16 %v500, %v499
    %v519 = vpack.c.b16 %v502, %v501
    %v520 = vpack.c.b16 %v504, %v503
    %537 = vmatpush.bf16.msra.mxu0 %v512
    %538 = vmatpush.bf16.msra.mxu0 %v511
    %539 = vmatpush.bf16.msra.mxu0 %v510
    %540 = vmatpush.bf16.msra.mxu0 %v509
    %541 = vmatpush.bf16.msra.mxu0 %v508
    %542 = vmatpush.bf16.msra.mxu0 %v507
    %543 = vmatpush.bf16.msra.mxu0 %v506
    %544 = vmatpush.bf16.msra.mxu0 %v505
    %545 = vmatmul.bf16.gmra.mxu0 %v405
    %v546 = vpop.f32.mrf.mxu0
    %v547 = vadd.f32 %v440, %v546
    %v548 = vpop.f32.mrf.mxu0
    %549 = vdwg.mxu0
    %550 = vmatpush.bf16.msra.mxu0 %v520
    %551 = vmatpush.bf16.msra.mxu0 %v519
    %552 = vmatpush.bf16.msra.mxu0 %v518
    %553 = vmatpush.bf16.msra.mxu0 %v517
    %554 = vmatpush.bf16.msra.mxu0 %v516
    %555 = vmatpush.bf16.msra.mxu0 %v515
    %556 = vmatpush.bf16.msra.mxu0 %v514
    %557 = vmatpush.bf16.msra.mxu0 %v513
    %558 = vmatmul.bf16.gmra.mxu0 %v406
    %v559 = vpop.f32.mrf.mxu0
    %v560 = vadd.f32 %v547, %v559
    %v561 = vpop.f32.mrf.mxu0
    %562 = vdwg.mxu0
    %v563 = vtanh.pop %v560
    %v564 = vld [vmem:[%s5 + $0x1] sm:$0x1]
    %v565 = vperm.slane %v564, 0
    %v566 = vmul.f32 %v563, %v565
    %v567 = vld [vmem:[%s5 + $0x2] sm:$0x1]
    %v568 = vperm.slane %v567, 0
    %v569 = vadd.f32 %v566, %v568
    %570 = vst [vmem:[#allocation11] sm:$0xff] %v569
    // Predicated region
    $region46: #{tpu_custom_call.1} parent=1 // pred_check
      _
    $region47: #{tpu_custom_call.1} parent=1 // pred_check_branch
      %572 = sbr.rel (0) target = $region49
    $region48: #{tpu_custom_call.1} parent=1 // pred_region
      %574 = vsyncadd [#allocation4], 0
      %s576 = sshll.u32 [#allocation11], 4
      %s577 = int_to_ptr.vmem [resolvable:$true] %s576
      %s578 = sshll.u32 %s6, 4
      %s579 = int_to_ptr.hbm [resolvable:$true] %s578
      %581 = dma.vmem_to_hbm [thread:$0]  %s577, 128, %s579, [#allocation4]
    $region49: #{tpu_custom_call.1} parent=1 // pred_fallthru
      _
    // Predicated region
    $region50: #{tpu_custom_call.1} parent=1 // pred_check
      _
    $region51: #{tpu_custom_call.1} parent=1 // pred_check_branch
      %583 = sbr.rel (0) target = $region53
    $region52: #{tpu_custom_call.1} parent=1 // pred_region
      %585 = dma.done [#allocation4], 128
    $region53: #{tpu_custom_call.1} parent=1 // pred_fallthru
      _
    %586 = vsyncpa [#allocation3], 1
    %587 = vsyncpa [#allocation6], 1
    %588 = vsyncpa [#allocation9], 1
    %589 = vsyncpa [#allocation4], 1

</llo_original>
